<compile_context>
chip_gen: v7x
topology: tpu7x:2x2x1
jax: 0.10.0
libtpu: 0.0.40
codegen_flags: <defaults>
</compile_context>

<pallas_src>
import jax
import jax.numpy as jnp
from jax.experimental import pallas as pl
from jax.experimental.pallas import tpu as pltpu


def _dropconnect_kernel(scale_ref, keep_ref, x_ref, o_ref):
    """One grid step = one (sample, feature-tile) pair.

    scale_ref: SMEM (B,) f32  -- mask / keep_rate per sample
    keep_ref : SMEM (B,) i32  -- 1 = keep, 0 = drop per sample
    x_ref / o_ref: VMEM (tile_rows, lane) tile of the flattened features.
    """
    b = pl.program_id(0)
    keep = keep_ref[b]

    @pl.when(keep == 1)
    def _():
        # Multiply in f32 then cast: matches PyTorch's x.div(keep) * mask for
        # bf16 inputs (no scale quantization); free, since we're HBM-bound.
        o_ref[...] = (x_ref[...].astype(jnp.float32) * scale_ref[b]).astype(
            o_ref.dtype)

    @pl.when(keep == 0)
    def _():
        # Dropped sample: never read x_ref (its block index was redirected to
        # (0,0,0) by the index_map, so no fresh HBM fetch happened either).
        o_ref[...] = jnp.zeros_like(o_ref)


def _hw_block_budget():
    """(target_block_bytes, vmem_limit_bytes), tuned per TPU generation."""
    try:
        vmem = pltpu.get_tpu_info().vmem_capacity_bytes
    except Exception:
        vmem = 128 << 20                       # assume v5e/v6e-class if unknown
    if vmem <= (64 << 20) + (1 << 20):         # v7x: 64 MiB VMEM, 3.2 TB/s HBM
        return 4 << 20, 48 << 20
    # v5e / v6e: 128 MiB physical VMEM; raise the scoped limit past the
    # 16/32 MiB defaults so 4 MiB blocks stay double-buffered (in+out).
    return 4 << 20, 64 << 20


def _choose_tile(n_feat, dtype, target_block_bytes):
    """Pick (lane_width, rows, tile_rows) for the flattened feature volume.

    Returns None when n_feat is not a multiple of 128 (caller falls back).
    """
    itemsize = jnp.dtype(dtype).itemsize
    sub = max(8, 32 // itemsize)               # full sublanes: 8 f32, 16 bf16
    candidates = [c for c in (512, 256, 128) if n_feat % c == 0]
    if not candidates:
        # TODO(synk): pad+mask Pallas path for C*H*W not divisible by 128.
        return None
    # Widest lane that still keeps >= one full set of sublanes; otherwise the
    # narrowest divisor (densest vregs / vst traffic for tiny volumes).
    full = [c for c in candidates if (n_feat // c) >= sub]
    lane = full[0] if full else candidates[-1]
    rows = n_feat // lane
    if rows <= sub:
        tile_rows = rows
    else:
        target_rows = max(sub, target_block_bytes // (lane * itemsize))
        tile_rows = min(rows, (target_rows // sub) * sub)
    return lane, rows, tile_rows


def dropconnect(x, drop_rate, *, seed=0, training=True, force_pallas=False):
    """x: NCHW float array. Matches DropConnect.forward."""
    if (not training) or drop_rate == 0.0:
        return x
    keep_rate = 1.0 - float(drop_rate)
    B = x.shape[0]
    N = 1
    for d in x.shape[1:]:
        N *= d

    # Per-sample Bernoulli(keep_rate), PyTorch-style: floor(U[0,1) + keep).
    # NOTE: mix a per-layer salt into `seed` when this module is instantiated
    # several times, otherwise drop decisions are correlated across layers.
    r = jax.random.uniform(jax.random.PRNGKey(seed), (B,), dtype=jnp.float32)
    mask = jnp.floor(r + jnp.float32(keep_rate))
    scale = mask * jnp.float32(1.0 / keep_rate)        # 0.0 or 1/keep_rate
    keep = mask.astype(jnp.int32)                      # 0 or 1

    itemsize = jnp.dtype(x.dtype).itemsize
    total_bytes = B * N * itemsize
    target_block_bytes, vmem_limit = _hw_block_budget()
    tiling = _choose_tile(N, x.dtype, target_block_bytes)

    # Escape hatch: tiny inputs (grid of 1-2 steps has zero pipeline depth and
    # the fixed pallas_call/step overhead dominates) or unsupported lane width
    # -> let XLA fuse the broadcast-multiply into a single memory pass.
    if tiling is None or (not force_pallas and total_bytes < (4 << 20)):
        bshape = (B,) + (1,) * (x.ndim - 1)
        return (x.astype(jnp.float32) * scale.reshape(bshape)).astype(x.dtype)

    lane, rows, tile_rows = tiling
    x2 = x.reshape(B, rows, lane)
    num_tiles = pl.cdiv(rows, tile_rows)

    def x_index_map(b, s, scale_ref, keep_ref):
        # Dropped samples -> block (0,0,0); identical block indices make the
        # pipeline skip the HBM fetch (saves ~drop_rate of read bandwidth).
        k = keep_ref[b]
        return (b * k, s * k, 0)

    def o_index_map(b, s, scale_ref, keep_ref):
        return (b, s, 0)

    out = pl.pallas_call(
        _dropconnect_kernel,
        out_shape=jax.ShapeDtypeStruct((B, rows, lane), x.dtype),
        grid_spec=pltpu.PrefetchScalarGridSpec(
            num_scalar_prefetch=2,                 # scale + keep live in SMEM
            grid=(B, num_tiles),
            in_specs=[pl.BlockSpec((None, tile_rows, lane), x_index_map)],
            out_specs=pl.BlockSpec((None, tile_rows, lane), o_index_map),
        ),
        compiler_params=pltpu.CompilerParams(
            # Every (b, s) step writes an independent output block: both axes
            # are legitimately parallel -> megacore split on v7x even at B=1.
            dimension_semantics=("parallel", "parallel"),
            vmem_limit_bytes=vmem_limit,
        ),
        # NOTE: input_output_aliases (x -> out) would drop the extra B*C*H*W
        # HBM allocation but is only valid if the caller donates x; omitted.
    )(scale, keep, x2)
    return out.reshape(x.shape)


if __name__ == "__main__":
    key = jax.random.PRNGKey(0)
    # NCHW input, consistent with how this module is used after conv layers.
    x = jax.random.normal(key, (2, 4, 16, 16), dtype=jnp.float32)
    drop_rate = 0.2
    keep_rate = 1.0 - drop_rate

    # Force the Pallas path (the default wrapper would route this 8 KiB/sample
    # input through the fused-XLA escape hatch).
    y = dropconnect(x, drop_rate, seed=0, training=True, force_pallas=True)
    jax.block_until_ready(y)

    # Sanity: each sample is either exactly zero or exactly x / keep_rate.
    y_np = jax.device_get(y)
    x_np = jax.device_get(x)
    for b in range(x_np.shape[0]):
        is_zero = bool((abs(y_np[b]) == 0.0).all())
        is_scaled = bool((abs(y_np[b] - x_np[b] / keep_rate) < 1e-5).all())
        assert is_zero or is_scaled, f"sample {b}: unexpected output"

    # Escape-hatch (fused XLA) path must agree with the kernel path.
    y_small = dropconnect(x, drop_rate, seed=0, training=True)
    assert bool((abs(jax.device_get(y_small) - y_np) < 1e-6).all())

    # Eval mode must be identity.
    y_eval = dropconnect(x, drop_rate, seed=0, training=False)
    assert bool((jax.device_get(y_eval) == x_np).all())

    print("KERNEL_OK")
</pallas_src>

<mosaic_0001>
module attributes {stable_mosaic.version = 11 : i64} {
  func.func @_dropconnect_kernel(%arg0: i32, %arg1: i32, %arg2: memref<2xf32, #tpu.memory_space<smem>>, %arg3: memref<2xi32, #tpu.memory_space<smem>>, %arg4: memref<1x8x128xf32, #tpu.memory_space<vmem>>, %arg5: memref<1x8x128xf32, #tpu.memory_space<vmem>>) attributes {dimension_semantics = [#tpu.dimension_semantics<parallel>, #tpu.dimension_semantics<parallel>], iteration_bounds = array<i64: 2, 1>, scalar_prefetch = 2 : i64, scratch_operands = 0 : i64, tpu.core_type = #tpu.core_type<tc>, window_params = [{transform_indices = @transform_0, window_bounds = array<i64: 1, 8, 128>}, {transform_indices = @transform_1, window_bounds = array<i64: 1, 8, 128>}]} {
    %0 = arith.index_cast %arg0 : i32 to index
    %1 = memref.load %arg3[%0] : memref<2xi32, #tpu.memory_space<smem>>
    %c1_i32 = arith.constant 1 : i32
    %2 = arith.cmpi eq, %1, %c1_i32 : i32
    %3 = arith.extui %2 : i1 to i32
    %c0_i32 = arith.constant 0 : i32
    %4 = arith.cmpi ne, %3, %c0_i32 : i32
    scf.if %4 {
      %c0 = arith.constant 0 : index
      %c0_2 = arith.constant 0 : index
      %c0_3 = arith.constant 0 : index
      %8 = vector.load %arg4[%c0, %c0_2, %c0_3] : memref<1x8x128xf32, #tpu.memory_space<vmem>>, vector<1x8x128xf32>
      %9 = vector.shape_cast %8 : vector<1x8x128xf32> to vector<8x128xf32>
      %10 = arith.index_cast %arg0 : i32 to index
      %11 = memref.load %arg2[%10] : memref<2xf32, #tpu.memory_space<smem>>
      %12 = vector.broadcast %11 : f32 to vector<8x128xf32>
      %13 = arith.mulf %9, %12 : vector<8x128xf32>
      %c0_4 = arith.constant 0 : index
      %c0_5 = arith.constant 0 : index
      %c0_6 = arith.constant 0 : index
      %14 = vector.load %arg5[%c0_4, %c0_5, %c0_6] : memref<1x8x128xf32, #tpu.memory_space<vmem>>, vector<1x8x128xf32>
      %15 = vector.shape_cast %14 : vector<1x8x128xf32> to vector<8x128xf32>
      %16 = vector.shape_cast %13 : vector<8x128xf32> to vector<1x8x128xf32>
      tpu.vector_store %arg5[%c0_4, %c0_5, %c0_6], %16 {strides = array<i32>} : memref<1x8x128xf32, #tpu.memory_space<vmem>>, vector<1x8x128xf32>,
    } else {
    }
    %c0_i32_0 = arith.constant 0 : i32
    %5 = arith.cmpi eq, %1, %c0_i32_0 : i32
    %6 = arith.extui %5 : i1 to i32
    %c0_i32_1 = arith.constant 0 : i32
    %7 = arith.cmpi ne, %6, %c0_i32_1 : i32
    scf.if %7 {
      %cst = arith.constant 0.000000e+00 : f32
      %8 = vector.broadcast %cst : f32 to vector<8x128xf32>
      %c0 = arith.constant 0 : index
      %c0_2 = arith.constant 0 : index
      %c0_3 = arith.constant 0 : index
      %9 = vector.load %arg5[%c0, %c0_2, %c0_3] : memref<1x8x128xf32, #tpu.memory_space<vmem>>, vector<1x8x128xf32>
      %10 = vector.shape_cast %9 : vector<1x8x128xf32> to vector<8x128xf32>
      %11 = vector.shape_cast %8 : vector<8x128xf32> to vector<1x8x128xf32>
      tpu.vector_store %arg5[%c0, %c0_2, %c0_3], %11 {strides = array<i32>} : memref<1x8x128xf32, #tpu.memory_space<vmem>>, vector<1x8x128xf32>,
    } else {
    }
    return
  }
  func.func @transform_0(%arg0: i32, %arg1: i32, %arg2: memref<2xf32, #tpu.memory_space<smem>>, %arg3: memref<2xi32, #tpu.memory_space<smem>>) -> (i32, i32, i32) {
    %0 = arith.index_cast %arg0 : i32 to index
    %1 = memref.load %arg3[%0] : memref<2xi32, #tpu.memory_space<smem>>
    %2 = arith.muli %arg0, %1 : i32
    %3 = arith.muli %arg1, %1 : i32
    %c0_i32 = arith.constant 0 : i32
    %c0_i32_0 = arith.constant 0 : i32
    return %2, %3, %c0_i32 : i32, i32, i32
  }
  func.func @transform_1(%arg0: i32, %arg1: i32, %arg2: memref<2xf32, #tpu.memory_space<smem>>, %arg3: memref<2xi32, #tpu.memory_space<smem>>) -> (i32, i32, i32) {
    %c0_i32 = arith.constant 0 : i32
    %c0_i32_0 = arith.constant 0 : i32
    return %arg0, %arg1, %c0_i32 : i32, i32, i32
  }
}

</mosaic_0001>

<llo_original>
// kernel: tpu_custom_call.1
$region0: #{tpu_custom_call.1}
  #allocation0 [shape = 'u32[]', space=smem, size = 0x4, offset = 0x4, fixed_abs, tag = 'smem constant byte address 0x4 - core index']
  #allocation1 [shape = 'u32[144,128]{1,0:T(1,128)}', space=vmem, size = 0x12000, scoped, tag = 'internal scratch']
  #allocation2 [shape = 's32[1]{0}', space=sflag, size = 0x4, scoped, tag = 'scoped memory for tpu_custom_call.1']
  #allocation3 [shape = 'u8[512]{0}', space=smem, size = 0x200, scoped, tag = 'prefetched SMEM operand 0']
  #allocation4 [shape = 'u8[512]{0}', space=smem, size = 0x200, scoped, tag = 'prefetched SMEM operand 1']
  %s0 = inlined_call_operand.hbm [shape: f32[2], index: 0, kind: input, shape index: {}]
  %s1 = inlined_call_operand.hbm [shape: s32[2], index: 1, kind: input, shape index: {}]
  %s2 = inlined_call_operand.hbm [shape: f32[2,8,128], index: 2, kind: input, shape index: {}]
  %s3 = inlined_call_operand.hbm [shape: f32[2,8,128], index: 3, kind: output, shape index: {}]
  %s4 = sld [smem:[#allocation0]]
  $region49: #{tpu_custom_call.1} parent=0
    _
  %s6 = ssub.s32 1, %s4
  %s7 = scalar_select 0, %s6, %s4
  %9 = dma.hbm_to_smem %s0, 16, [#allocation3], [#allocation2]
  %11 = dma.hbm_to_smem %s1, 16, [#allocation4], [#allocation2]
  %12 = dma.done [#allocation2], 32
  %13 = sfence
  $region1: #{tpu_custom_call.1} parent=0
    #allocation5 [shape = 'u8[8192]{0}', space=vmem, size = 0x2000, scoped, tag = 'input window, operand 2']
    #allocation6 [shape = 's32[2]{0}', space=sflag, size = 0x8, scoped, tag = 'scoped memory for tpu_custom_call.1']
    #allocation7 [shape = 's32[2]{0}', space=sflag, size = 0x8, scoped, tag = 'scoped memory for tpu_custom_call.1']
    #allocation8 [shape = 'u8[8192]{0}', space=vmem, size = 0x2000, scoped, tag = 'output window, operand 0']
    %14 = vsyncpa [#allocation6], 0
    %s15 = scalar_lea.sflag [#allocation6], 1
    %16 = vsyncpa %s15, 0
    %17 = vsyncpa [#allocation7], 0
    %s18 = scalar_lea.sflag [#allocation7], 1
    %19 = vsyncpa %s18, 0
    loop: start=0, step=1, limit=4
    $region2: #{tpu_custom_call.1} parent=1 // loop_pre_header
      _
    $region3: #{tpu_custom_call.1} parent=1 // loop_header
      %s21 = sphi 0, %s25
      %p22 = scmp.ge.s32.totalorder %s21, 4
      %s28 = sphi 0, %s40
      %s29 = sphi 0, %s36
      %s30 = sphi 0, %s28
      %s31 = sphi 0, %s29
      %s32 = sphi 0, %s30
      %s33 = sphi 0, %s31
      %s51 = sphi 0, %s53
      %s54 = sphi 0, %s51
      %s55 = sphi 0, %s54
      %s71 = sphi 0, %s55
      %s79 = sphi 0, %s81
      %s82 = sphi 0, %s79
      %s83 = sphi 0, %s82
      %s99 = sphi 0, %s83
    $region4: #{tpu_custom_call.1} parent=1 // loop_header_branch
      %24 = sbr.rel (%p22) target = $region8
    $region5: #{tpu_custom_call.1} parent=1 // loop_body
      %s26 = ssub.s32 %s21, 1
      %s27 = ssub.s32 %s21, 2
      %s34 = sadd.s32 1, %s29
      %p35 = scmp.ge.s32.totalorder %s34, 1
      %s36 = scalar_select %p35, 0, %s34
      %s37 = sadd.s32 1, %s28
      %s38 = scalar_select %p35, %s37, %s28
      %p39 = scmp.ge.s32.totalorder %s38, 2
      %s40 = scalar_select %p39, 0, %s38
      %s41 = sld [smem:[#allocation4 + %s28]]
      %s42 = smul.u32 %s28, %s41
      %s43 = smul.u32 %s29, %s41
      %s44 = sld [smem:[#allocation4 + %s40]]
      %s45 = smul.u32 %s40, %s44
      %s46 = smul.u32 %s36, %s44
      %s47 = ssub.s32 %s42, %s45
      %s48 = ssub.s32 %s43, %s46
      %s49 = sor.u32 %s47, %s48
      %p50 = scmp.eq.s32.totalorder %s49, 0
      %s52 = sadd.s32 %s51, 1
      %s53 = scalar_select %p50, %s51, %s52
      %p56 = pneg %p50
      %p57 = scmp.eq.s32.totalorder %s21, 1
      %p58 = por %p56, %p57
      %p59 = scmp.ne.s32.totalorder %s51, %s54
      %p60 = scmp.eq.s32.totalorder %s21, 0
      %p61 = por %p59, %p60
      %p62 = scmp.ne.s32.totalorder %s51, %s54
      %p63 = scmp.eq.s32.totalorder %s26, 1
      %p64 = por %p62, %p63
      %p65 = scmp.ne.s32.totalorder %s54, %s55
      %p66 = scmp.eq.s32.totalorder %s26, 0
      %p67 = por %p65, %p66
      %p68 = scmp.ne.s32.totalorder %s54, %s55
      %p69 = scmp.eq.s32.totalorder %s27, 1
      %p70 = por %p68, %p69
      %p72 = scmp.ne.s32.totalorder %s55, %s71
      %p73 = scmp.eq.s32.totalorder %s27, 0
      %p74 = por %p72, %p73
      %s75 = ssub.s32 %s28, %s40
      %s76 = ssub.s32 %s29, %s36
      %s77 = sor.u32 %s75, %s76
      %p78 = scmp.eq.s32.totalorder %s77, 0
      %s80 = sadd.s32 %s79, 1
      %s81 = scalar_select %p78, %s79, %s80
      %p84 = pneg %p78
      %p85 = scmp.eq.s32.totalorder %s21, 1
      %p86 = por %p84, %p85
      %p87 = scmp.ne.s32.totalorder %s79, %s82
      %p88 = scmp.eq.s32.totalorder %s21, 0
      %p89 = por %p87, %p88
      %p90 = scmp.ne.s32.totalorder %s79, %s82
      %p91 = scmp.eq.s32.totalorder %s26, 1
      %p92 = por %p90, %p91
      %p93 = scmp.ne.s32.totalorder %s82, %s83
      %p94 = scmp.eq.s32.totalorder %s26, 0
      %p95 = por %p93, %p94
      %p96 = scmp.ne.s32.totalorder %s82, %s83
      %p97 = scmp.eq.s32.totalorder %s27, 1
      %p98 = por %p96, %p97
      %p100 = scmp.ne.s32.totalorder %s83, %s99
      %p101 = scmp.eq.s32.totalorder %s27, 0
      %p102 = por %p100, %p101
      %p103 = scmp.le.s32.totalorder 1, %s21
      %p104 = scmp.lt.s32.totalorder %s21, 3
      %p105 = pnand %p103, %p104
      %p106 = pneg %p105
      // Predicated region
      $region9: #{tpu_custom_call.1} parent=5 // pred_check
        _
      $region10: #{tpu_custom_call.1} parent=5 // pred_check_branch
        %108 = sbr.rel (%p105) target = $region12
      $region11: #{tpu_custom_call.1} parent=5 // pred_region
        %s109 = ssub.s32 %s21, 1
      $region12: #{tpu_custom_call.1} parent=5 // pred_fallthru
        _
      %p110 = scmp.lt.s32.totalorder %s21, 2
      // Predicated region
      $region13: #{tpu_custom_call.1} parent=5 // pred_check
        %p111 = pneg %p110
      $region14: #{tpu_custom_call.1} parent=5 // pred_check_branch
        %113 = sbr.rel (%p111) target = $region16
      $region15: #{tpu_custom_call.1} parent=5 // pred_region
        // Predicated region
        $region17: #{tpu_custom_call.1} parent=15 // pred_check
          %p114 = pneg %p61
        $region18: #{tpu_custom_call.1} parent=15 // pred_check_branch
          %116 = sbr.rel (%p114) target = $region20
        $region19: #{tpu_custom_call.1} parent=15 // pred_region
          %s117 = sand.u32 %s51, 1
          %s118 = scalar_lea.sflag [#allocation6], %s117
          %s119 = sand.u32 %s51, 1
          %s120 = smul.addr %s119, 8
          %s121 = scalar_lea.vmem [#allocation5], %s120
          %s122 = sld [smem:[#allocation4 + %s28]]
          %s123 = smul.u32 %s28, %s122
          %s124 = smul.u32 %s29, %s122
          %s126 = ssub.s32 128, 128
          %127 = vsyncadd %s118, %s126
          %s128 = sadd.s32 %s124, %s123
          %s129 = smul.addr %s128, 128
          %s130 = scalar_lea.hbm %s2, %s129
          %s132 = sshll.u32 %s121, 4
          %s133 = int_to_ptr.vmem [resolvable:$true] %s132
          %135 = dma.hbm_to_vmem [thread:$0]  %s130, 128, %s133, %s118
        $region20: #{tpu_custom_call.1} parent=15 // pred_fallthru
          _
      $region16: #{tpu_custom_call.1} parent=5 // pred_fallthru
        _
      %p136 = scmp.le.s32.totalorder 1, %s21
      %p137 = scmp.lt.s32.totalorder %s21, 3
      %p138 = pnand %p136, %p137
      %p139 = pneg %p138
      // Predicated region
      $region21: #{tpu_custom_call.1} parent=5 // pred_check
        _
      $region22: #{tpu_custom_call.1} parent=5 // pred_check_branch
        %141 = sbr.rel (%p138) target = $region24
      $region23: #{tpu_custom_call.1} parent=5 // pred_region
        %s142 = ssub.s32 %s21, 1
        %s143 = sand.u32 %s54, 1
        %s144 = scalar_lea.sflag [#allocation6], %s143
        %s145 = sand.u32 %s54, 1
        %s146 = smul.addr %s145, 8
        %s147 = scalar_lea.vmem [#allocation5], %s146
        // Predicated region
        $region25: #{tpu_custom_call.1} parent=23 // pred_check
          %p148 = pneg %p67
        $region26: #{tpu_custom_call.1} parent=23 // pred_check_branch
          %150 = sbr.rel (%p148) target = $region28
        $region27: #{tpu_custom_call.1} parent=23 // pred_region
          %151 = dma.done %s144, 128
        $region28: #{tpu_custom_call.1} parent=23 // pred_fallthru
          _
        %s152 = sand.u32 %s54, 1
        %s153 = scalar_lea.sflag [#allocation6], %s152
        %s154 = sand.u32 %s54, 1
        %s155 = smul.addr %s154, 8
        %s156 = scalar_lea.vmem [#allocation5], %s155
        %p157 = pneg %p67
        %p158 = pneg %p64
        %p159 = pneg %p95
        %p160 = pneg %p92
        %s161 = sand.u32 %s82, 1
        %s162 = scalar_lea.sflag [#allocation7], %s161
        %s163 = sand.u32 %s82, 1
        %s164 = smul.addr %s163, 8
        %s165 = scalar_lea.vmem [#allocation8], %s164
        %s166 = sld [smem:[#allocation4 + %s30]]
        %s167 = smul.u32 %s30, %s166
        %s168 = smul.u32 %s31, %s166
        %s169 = sld [smem:[#allocation4 + %s30]]
        %p170 = scmp.eq.s32.totalorder %s169, 1
        // Predicated region
        $region29: #{tpu_custom_call.1} parent=23 // pred_check
          %p171 = pneg %p170
        $region30: #{tpu_custom_call.1} parent=23 // pred_check_branch
          %173 = sbr.rel (%p171) target = $region32
        $region31: #{tpu_custom_call.1} parent=23 // pred_region
          %v174 = vld [vmem:[%s147] sm:$0xff]
          %s175 = sld [smem:[#allocation3 + %s30]]
          %v176 = vstv %s175
          %v177 = vmul.f32 %v174, %v176
          %178 = vst [vmem:[%s165] sm:$0xff] %v177
        $region32: #{tpu_custom_call.1} parent=23 // pred_fallthru
          _
        %p179 = scmp.eq.s32.totalorder %s169, 0
        // Predicated region
        $region33: #{tpu_custom_call.1} parent=23 // pred_check
          %p180 = pneg %p179
        $region34: #{tpu_custom_call.1} parent=23 // pred_check_branch
          %182 = sbr.rel (%p180) target = $region36
        $region35: #{tpu_custom_call.1} parent=23 // pred_region
          %183 = vst [vmem:[%s165] sm:$0xff] 0.0
        $region36: #{tpu_custom_call.1} parent=23 // pred_fallthru
          _
        %s184 = sand.u32 %s82, 1
        %s185 = scalar_lea.sflag [#allocation7], %s184
        %s186 = sand.u32 %s82, 1
        %s187 = smul.addr %s186, 8
        %s188 = scalar_lea.vmem [#allocation8], %s187
        // Predicated region
        $region37: #{tpu_custom_call.1} parent=23 // pred_check
          %p189 = pneg %p92
        $region38: #{tpu_custom_call.1} parent=23 // pred_check_branch
          %191 = sbr.rel (%p189) target = $region40
        $region39: #{tpu_custom_call.1} parent=23 // pred_region
          %s193 = ssub.s32 128, 128
          %194 = vsyncadd %s185, %s193
          %s195 = sadd.s32 %s31, %s30
          %s196 = smul.addr %s195, 128
          %s197 = scalar_lea.hbm %s3, %s196
          %s199 = sshll.u32 %s188, 4
          %s200 = int_to_ptr.vmem [resolvable:$true] %s199
          %202 = dma.vmem_to_hbm [thread:$0]  %s200, 128, %s197, %s185
        $region40: #{tpu_custom_call.1} parent=23 // pred_fallthru
          _
      $region24: #{tpu_custom_call.1} parent=5 // pred_fallthru
        _
      %p203 = scmp.le.s32.totalorder 2, %s21
      // Predicated region
      $region41: #{tpu_custom_call.1} parent=5 // pred_check
        %p204 = pneg %p203
      $region42: #{tpu_custom_call.1} parent=5 // pred_check_branch
        %206 = sbr.rel (%p204) target = $region44
      $region43: #{tpu_custom_call.1} parent=5 // pred_region
        %s207 = ssub.s32 %s21, 2
        // Predicated region
        $region45: #{tpu_custom_call.1} parent=43 // pred_check
          %p208 = pneg %p98
        $region46: #{tpu_custom_call.1} parent=43 // pred_check_branch
          %210 = sbr.rel (%p208) target = $region48
        $region47: #{tpu_custom_call.1} parent=43 // pred_region
          %s211 = sand.u32 %s83, 1
          %s212 = scalar_lea.sflag [#allocation7], %s211
          %s213 = sand.u32 %s83, 1
          %s214 = smul.addr %s213, 8
          %s215 = scalar_lea.vmem [#allocation8], %s214
          %216 = dma.done %s212, 128
        $region48: #{tpu_custom_call.1} parent=43 // pred_fallthru
          _
      $region44: #{tpu_custom_call.1} parent=5 // pred_fallthru
        _
    $region6: #{tpu_custom_call.1} parent=1 // loop_footer
      %s25 = sadd.s32 1, %s21
    $region7: #{tpu_custom_call.1} parent=1 // loop_footer_branch
      %20 = sbr.rel target = $region3
    $region8: #{tpu_custom_call.1} parent=1 // loop_exit
      _
    %217 = vsyncpa [#allocation6], 1
    %s218 = scalar_lea.sflag [#allocation6], 1
    %219 = vsyncpa %s218, 1
    %220 = vsyncpa [#allocation7], 1
    %s221 = scalar_lea.sflag [#allocation7], 1
    %222 = vsyncpa %s221, 1

</llo_original>
